<compile_context>
chip_gen: v7x
topology: tpu7x:2x2x1
jax: 0.10.0
libtpu: 0.0.40
codegen_flags: <defaults>
</compile_context>

<pallas_src>
import functools

import jax
import jax.numpy as jnp
from jax.experimental import pallas as pl
from jax.experimental.pallas import tpu as pltpu

LANES = 128
SUBLANES = 8
# 1024 rows x 128 lanes per grid step -> 512 KiB per f32 input block.
TILE_ROWS = 1024


def _cf_loss_kernel(w_ref, p_ref, t_ref, o_ref, *, t8, r8_valid, needs_mask):
    # Cast to f32 BEFORE subtracting so bf16 inputs don't lose precision to
    # cancellation; no-ops for f32 inputs.
    w = w_ref[...].astype(jnp.float32)
    p = p_ref[...].astype(jnp.float32)
    t = t_ref[...].astype(jnp.float32)
    d = p - t
    wse = w * d * d

    if needs_mask:
        # Only the last grid step can read past the (tile-padded) array; zero
        # out garbage (8,128) tiles by global tile index (compile-time bound).
        sid = pl.program_id(0) * t8 + jax.lax.broadcasted_iota(
            jnp.int32, wse.shape, 0)
        wse = jnp.where(sid < r8_valid, wse, 0.0)

    # Partial reduction over the leading (vreg) axis only: pure VPU adds; the
    # cross-lane/sublane reduce happens once, outside the kernel.
    o_ref[...] = jnp.sum(wse, axis=0, keepdims=True)


def cf_loss(cf_weights, pred, truth):
    """JAX/Pallas equivalent of cf_loss.forward: mean(cf_weights * (pred - truth)**2)."""
    assert cf_weights.shape == pred.shape == truth.shape
    n = pred.size
    out_dtype = jnp.result_type(cf_weights.dtype, pred.dtype, truth.dtype)

    chunk = SUBLANES * LANES  # 1024 elements = one (8,128) tile
    n_pad = ((n + chunk - 1) // chunk) * chunk

    def prep(x):
        # Flatten (free for contiguous arrays), keep native dtype, pad with
        # zeros only when ragged (zeros contribute 0 to the weighted SSE).
        f = x.reshape(-1)
        if n_pad != n:
            f = jnp.pad(f, (0, n_pad - n))
        return f.reshape(n_pad // chunk, SUBLANES, LANES)

    w3, p3, t3 = prep(cf_weights), prep(pred), prep(truth)

    r8 = n_pad // chunk                   # number of (8,128) tiles
    t8 = min(TILE_ROWS // SUBLANES, r8)   # tiles per grid step
    num_tiles = (r8 + t8 - 1) // t8
    needs_mask = (r8 % t8) != 0

    kernel = functools.partial(
        _cf_loss_kernel, t8=t8, r8_valid=r8, needs_mask=needs_mask)

    partials = pl.pallas_call(
        kernel,
        out_shape=jax.ShapeDtypeStruct((num_tiles, SUBLANES, LANES), jnp.float32),
        grid_spec=pltpu.PrefetchScalarGridSpec(
            num_scalar_prefetch=0,
            grid=(num_tiles,),
            in_specs=[
                pl.BlockSpec((t8, SUBLANES, LANES), lambda i: (i, 0, 0)),
                pl.BlockSpec((t8, SUBLANES, LANES), lambda i: (i, 0, 0)),
                pl.BlockSpec((t8, SUBLANES, LANES), lambda i: (i, 0, 0)),
            ],
            out_specs=pl.BlockSpec((1, SUBLANES, LANES), lambda i: (i, 0, 0)),
        ),
        compiler_params=pltpu.CompilerParams(
            dimension_semantics=("parallel",)),
    )(w3, p3, t3)

    # Tiny final reduction + divide by the ORIGINAL element count == torch.mean.
    loss = jnp.sum(partials) / jnp.float32(n)
    return loss.astype(out_dtype)


if __name__ == "__main__":
    key = jax.random.PRNGKey(0)
    k_w, k_p, k_t = jax.random.split(key, 3)

    # Small NCHW shapes consistent with a regression loss over image-like preds.
    shape = (2, 4, 16, 16)
    cf_weights = jax.random.uniform(k_w, shape, dtype=jnp.float32) + 0.5
    pred = jax.random.normal(k_p, shape, dtype=jnp.float32)
    truth = jax.random.normal(k_t, shape, dtype=jnp.float32)

    loss = jax.block_until_ready(cf_loss(cf_weights, pred, truth))
    ref = jnp.mean(cf_weights * (pred - truth) ** 2)
    assert jnp.allclose(loss, ref, rtol=1e-5, atol=1e-6), (loss, ref)

    # Ragged element count exercises the zero-pad path.
    shape2 = (2, 3, 5, 7)
    w2 = jax.random.uniform(k_w, shape2, dtype=jnp.float32) + 0.5
    p2 = jax.random.normal(k_p, shape2, dtype=jnp.float32)
    t2 = jax.random.normal(k_t, shape2, dtype=jnp.float32)
    loss2 = jax.block_until_ready(cf_loss(w2, p2, t2))
    ref2 = jnp.mean(w2 * (p2 - t2) ** 2)
    assert jnp.allclose(loss2, ref2, rtol=1e-5, atol=1e-6), (loss2, ref2)

    print("KERNEL_OK")
</pallas_src>

<mosaic_0001>
module attributes {stable_mosaic.version = 11 : i64} {
  func.func @_cf_loss_kernel(%arg0: i32, %arg1: memref<2x8x128xf32, #tpu.memory_space<vmem>>, %arg2: memref<2x8x128xf32, #tpu.memory_space<vmem>>, %arg3: memref<2x8x128xf32, #tpu.memory_space<vmem>>, %arg4: memref<1x8x128xf32, #tpu.memory_space<vmem>>) attributes {dimension_semantics = [#tpu.dimension_semantics<parallel>], iteration_bounds = array<i64: 1>, scalar_prefetch = 0 : i64, scratch_operands = 0 : i64, tpu.core_type = #tpu.core_type<tc>, window_params = [{transform_indices = @transform_0, window_bounds = array<i64: 2, 8, 128>}, {transform_indices = @transform_1, window_bounds = array<i64: 2, 8, 128>}, {transform_indices = @transform_2, window_bounds = array<i64: 2, 8, 128>}, {transform_indices = @transform_3, window_bounds = array<i64: 1, 8, 128>}]} {
    %c0 = arith.constant 0 : index
    %c0_0 = arith.constant 0 : index
    %c0_1 = arith.constant 0 : index
    %0 = vector.load %arg1[%c0, %c0_0, %c0_1] : memref<2x8x128xf32, #tpu.memory_space<vmem>>, vector<2x8x128xf32>
    %c0_2 = arith.constant 0 : index
    %c0_3 = arith.constant 0 : index
    %c0_4 = arith.constant 0 : index
    %1 = vector.load %arg2[%c0_2, %c0_3, %c0_4] : memref<2x8x128xf32, #tpu.memory_space<vmem>>, vector<2x8x128xf32>
    %c0_5 = arith.constant 0 : index
    %c0_6 = arith.constant 0 : index
    %c0_7 = arith.constant 0 : index
    %2 = vector.load %arg3[%c0_5, %c0_6, %c0_7] : memref<2x8x128xf32, #tpu.memory_space<vmem>>, vector<2x8x128xf32>
    %3 = arith.subf %1, %2 : vector<2x8x128xf32>
    %4 = arith.mulf %0, %3 : vector<2x8x128xf32>
    %5 = arith.mulf %4, %3 : vector<2x8x128xf32>
    %cst = arith.constant dense<0.000000e+00> : vector<8x128xf32>
    %6 = vector.multi_reduction <add>, %5, %cst [0] : vector<2x8x128xf32> to vector<8x128xf32>
    %7 = vector.shape_cast %6 : vector<8x128xf32> to vector<1x8x128xf32>
    %c0_8 = arith.constant 0 : index
    %c0_9 = arith.constant 0 : index
    %c0_10 = arith.constant 0 : index
    %8 = vector.load %arg4[%c0_8, %c0_9, %c0_10] : memref<1x8x128xf32, #tpu.memory_space<vmem>>, vector<1x8x128xf32>
    tpu.vector_store %arg4[%c0_8, %c0_9, %c0_10], %7 {strides = array<i32>} : memref<1x8x128xf32, #tpu.memory_space<vmem>>, vector<1x8x128xf32>,
    return
  }
  func.func @transform_0(%arg0: i32) -> (i32, i32, i32) {
    %c0_i32 = arith.constant 0 : i32
    %c0_i32_0 = arith.constant 0 : i32
    %c0_i32_1 = arith.constant 0 : i32
    return %arg0, %c0_i32, %c0_i32_0 : i32, i32, i32
  }
  func.func @transform_1(%arg0: i32) -> (i32, i32, i32) {
    %c0_i32 = arith.constant 0 : i32
    %c0_i32_0 = arith.constant 0 : i32
    %c0_i32_1 = arith.constant 0 : i32
    return %arg0, %c0_i32, %c0_i32_0 : i32, i32, i32
  }
  func.func @transform_2(%arg0: i32) -> (i32, i32, i32) {
    %c0_i32 = arith.constant 0 : i32
    %c0_i32_0 = arith.constant 0 : i32
    %c0_i32_1 = arith.constant 0 : i32
    return %arg0, %c0_i32, %c0_i32_0 : i32, i32, i32
  }
  func.func @transform_3(%arg0: i32) -> (i32, i32, i32) {
    %c0_i32 = arith.constant 0 : i32
    %c0_i32_0 = arith.constant 0 : i32
    %c0_i32_1 = arith.constant 0 : i32
    return %arg0, %c0_i32, %c0_i32_0 : i32, i32, i32
  }
}

</mosaic_0001>

<llo_original>
// kernel: tpu_custom_call.1
$region0: #{tpu_custom_call.1}
  #allocation0 [shape = 'u32[]', space=smem, size = 0x4, offset = 0x4, fixed_abs, tag = 'smem constant byte address 0x4 - core index']
  #allocation1 [shape = 'u32[144,128]{1,0:T(1,128)}', space=vmem, size = 0x12000, scoped, tag = 'internal scratch']
  %s0 = inlined_call_operand.hbm [shape: f32[2,8,128], index: 0, kind: input, shape index: {}]
  %s1 = inlined_call_operand.hbm [shape: f32[2,8,128], index: 1, kind: input, shape index: {}]
  %s2 = inlined_call_operand.hbm [shape: f32[2,8,128], index: 2, kind: input, shape index: {}]
  %s3 = inlined_call_operand.hbm [shape: f32[1,8,128], index: 3, kind: output, shape index: {}]
  %s4 = sld [smem:[#allocation0]]
  $region34: #{tpu_custom_call.1} parent=0
    _
  %s6 = ssub.s32 1, %s4
  %s7 = scalar_select 0, %s6, %s4
  $region1: #{tpu_custom_call.1} parent=0
    #allocation2 [shape = 'u8[8192]{0}', space=vmem, size = 0x2000, scoped, tag = 'input window, operand 0, single buffered']
    #allocation3 [shape = 's32[1]{0}', space=sflag, size = 0x4, scoped, tag = 'scoped memory for tpu_custom_call.1']
    #allocation4 [shape = 's32[1]{0}', space=sflag, size = 0x4, scoped, tag = 'scoped memory for tpu_custom_call.1']
    #allocation5 [shape = 'u8[8192]{0}', space=vmem, size = 0x2000, scoped, tag = 'input window, operand 1, single buffered']
    #allocation6 [shape = 's32[1]{0}', space=sflag, size = 0x4, scoped, tag = 'scoped memory for tpu_custom_call.1']
    #allocation7 [shape = 'u8[8192]{0}', space=vmem, size = 0x2000, scoped, tag = 'input window, operand 2, single buffered']
    #allocation8 [shape = 'u8[4096]{0}', space=vmem, size = 0x1000, scoped, tag = 'output window, operand 0, single buffered']
    %8 = vsyncpa [#allocation3], 0
    %9 = vsyncpa [#allocation6], 0
    %10 = vsyncpa [#allocation4], 0
    // Predicated region
    $region2: #{tpu_custom_call.1} parent=1 // pred_check
      _
    $region3: #{tpu_custom_call.1} parent=1 // pred_check_branch
      %12 = sbr.rel (0) target = $region5
    $region4: #{tpu_custom_call.1} parent=1 // pred_region
      %s14 = ssub.s32 256, 256
      %15 = vsyncadd [#allocation3], %s14
      %s16 = sshll.u32 [#allocation2], 4
      %s17 = int_to_ptr.vmem [resolvable:$true] %s16
      %22 = dma.hbm_to_vmem [thread:$0]  %s0, 256, %s17, [#allocation3], 128, 128, 8
    $region5: #{tpu_custom_call.1} parent=1 // pred_fallthru
      _
    // Predicated region
    $region6: #{tpu_custom_call.1} parent=1 // pred_check
      _
    $region7: #{tpu_custom_call.1} parent=1 // pred_check_branch
      %24 = sbr.rel (0) target = $region9
    $region8: #{tpu_custom_call.1} parent=1 // pred_region
      %s26 = ssub.s32 256, 256
      %27 = vsyncadd [#allocation6], %s26
      %s28 = sshll.u32 [#allocation5], 4
      %s29 = int_to_ptr.vmem [resolvable:$true] %s28
      %34 = dma.hbm_to_vmem [thread:$0]  %s1, 256, %s29, [#allocation6], 128, 128, 8
    $region9: #{tpu_custom_call.1} parent=1 // pred_fallthru
      _
    // Predicated region
    $region10: #{tpu_custom_call.1} parent=1 // pred_check
      _
    $region11: #{tpu_custom_call.1} parent=1 // pred_check_branch
      %36 = sbr.rel (0) target = $region13
    $region12: #{tpu_custom_call.1} parent=1 // pred_region
      %s38 = ssub.s32 256, 256
      %39 = vsyncadd [#allocation6], %s38
      %s40 = sshll.u32 [#allocation7], 4
      %s41 = int_to_ptr.vmem [resolvable:$true] %s40
      %46 = dma.hbm_to_vmem [thread:$0]  %s2, 256, %s41, [#allocation6], 128, 128, 8
    $region13: #{tpu_custom_call.1} parent=1 // pred_fallthru
      _
    // Predicated region
    $region14: #{tpu_custom_call.1} parent=1 // pred_check
      _
    $region15: #{tpu_custom_call.1} parent=1 // pred_check_branch
      %48 = sbr.rel (0) target = $region17
    $region16: #{tpu_custom_call.1} parent=1 // pred_region
      %49 = dma.done [#allocation3], 256
    $region17: #{tpu_custom_call.1} parent=1 // pred_fallthru
      _
    // Predicated region
    $region18: #{tpu_custom_call.1} parent=1 // pred_check
      _
    $region19: #{tpu_custom_call.1} parent=1 // pred_check_branch
      %51 = sbr.rel (0) target = $region21
    $region20: #{tpu_custom_call.1} parent=1 // pred_region
      %52 = dma.done [#allocation6], 256
    $region21: #{tpu_custom_call.1} parent=1 // pred_fallthru
      _
    // Predicated region
    $region22: #{tpu_custom_call.1} parent=1 // pred_check
      _
    $region23: #{tpu_custom_call.1} parent=1 // pred_check_branch
      %54 = sbr.rel (0) target = $region25
    $region24: #{tpu_custom_call.1} parent=1 // pred_region
      %55 = dma.done [#allocation6], 256
    $region25: #{tpu_custom_call.1} parent=1 // pred_fallthru
      _
    %v56 = vld [vmem:[#allocation2] sm:$0xff]
    %v57 = vld [vmem:[#allocation2 + $0x8] sm:$0xff]
    %v58 = vld [vmem:[#allocation5] sm:$0xff]
    %v59 = vld [vmem:[#allocation5 + $0x8] sm:$0xff]
    %v60 = vld [vmem:[#allocation7] sm:$0xff]
    %v61 = vld [vmem:[#allocation7 + $0x8] sm:$0xff]
    %v62 = vsub.f32 %v58, %v60
    %v63 = vsub.f32 %v59, %v61
    %v64 = vmul.f32 %v56, %v62
    %v65 = vmul.f32 %v57, %v63
    %v66 = vmul.f32 %v64, %v62
    %v67 = vmul.f32 %v65, %v63
    %v68 = vadd.f32 %v66, %v67
    %69 = vst [vmem:[#allocation8] sm:$0xff] %v68
    // Predicated region
    $region26: #{tpu_custom_call.1} parent=1 // pred_check
      _
    $region27: #{tpu_custom_call.1} parent=1 // pred_check_branch
      %71 = sbr.rel (0) target = $region29
    $region28: #{tpu_custom_call.1} parent=1 // pred_region
      %s73 = ssub.s32 128, 128
      %74 = vsyncadd [#allocation4], %s73
      %s76 = sshll.u32 [#allocation8], 4
      %s77 = int_to_ptr.vmem [resolvable:$true] %s76
      %79 = dma.vmem_to_hbm [thread:$0]  %s77, 128, %s3, [#allocation4]
    $region29: #{tpu_custom_call.1} parent=1 // pred_fallthru
      _
    // Predicated region
    $region30: #{tpu_custom_call.1} parent=1 // pred_check
      _
    $region31: #{tpu_custom_call.1} parent=1 // pred_check_branch
      %81 = sbr.rel (0) target = $region33
    $region32: #{tpu_custom_call.1} parent=1 // pred_region
      %82 = dma.done [#allocation4], 128
    $region33: #{tpu_custom_call.1} parent=1 // pred_fallthru
      _
    %83 = vsyncpa [#allocation3], 1
    %84 = vsyncpa [#allocation6], 1
    %85 = vsyncpa [#allocation4], 1

</llo_original>
